<compile_context>
chip_gen: v7x
topology: tpu7x:2x2x1
jax: 0.10.0
libtpu: 0.0.40
codegen_flags: <defaults>
</compile_context>

<pallas_src>
import functools

import jax
import jax.numpy as jnp
from jax.experimental import pallas as pl
from jax.experimental.pallas import tpu as pltpu


# ---------------- config (stands in for the `config` module) ----------------
class Config:
    beam_size = 4
    hidden_size = 32
    vocab_size = 128
    MAX_LENGTH = 6
    SOS_token = 1
    EOS_token = 2
    UNK_token = 3
    decoder_num_layers = 1


config = Config()

_LANES = 128
_SUBLANES = 8
_OUT_W = 256          # lane-dense width of the extended-vocab / logits outputs
_PADDED_BEAMS = 8     # beams padded to one full f32 sublane tile


# ---------------- Beam (kept for API parity with the reference) ----------------
class Beam:
    def __init__(self, tokens, log_probs, sec_hidden, decoder_hidden, encoder_outputs):
        self.tokens = tokens
        self.log_probs = log_probs
        self.sec_hidden = sec_hidden
        self.decoder_hidden = decoder_hidden
        self.encoder_outputs = encoder_outputs

    def extend(self, token, log_prob, sec_hidden, decoder_hidden, encoder_outputs):
        return Beam(self.tokens + [token], self.log_probs + [log_prob],
                    sec_hidden, decoder_hidden, encoder_outputs)

    @property
    def latest_token(self):
        return self.tokens[-1]

    @property
    def avg_log_prob(self):
        return sum(self.log_probs) / len(self.tokens)


# ---------------- Pallas decoder-step kernel ----------------
def _decoder_step_kernel(xh_ref, enc_sh_ref, enc_hs_ref, oh_ref, wg_ref, wo_ref,
                         b_ref, logp_ref, state_ref, *, hidden):
    H = hidden
    NB = xh_ref.shape[0]
    OUT = wo_ref.shape[1]

    xh = xh_ref[...]                                    # (NB, 2H) f32  [x | h_prev]
    x = xh[:, 0:H]
    h = xh[:, H:2 * H]
    enc_sh = enc_sh_ref[0]                              # (S, H) bf16
    enc_hs = enc_hs_ref[0]                              # (H, S) bf16
    b = b_ref[...]                                      # (8, OUT) f32

    # --- fused GRU cell: ONE MXU pass over [x|h] @ (2H, 128), lanes = [r|z|n_x|n_h] ---
    g = jnp.dot(xh.astype(jnp.bfloat16), wg_ref[...],
                preferred_element_type=jnp.float32)     # (NB, 128)
    g = g + b[0:1, 0:g.shape[1]]                        # [br|bz|bnx|bnh]
    r = jax.nn.sigmoid(g[:, 0:H])
    z = jax.nn.sigmoid(g[:, H:2 * H])
    n = jnp.tanh(g[:, 2 * H:3 * H] + r * g[:, 3 * H:4 * H])
    h_new = (1.0 - z) * n + z * h                       # (NB, H) f32

    # --- attention as two bf16 MXU matmuls (f32 accumulation, f32 softmax) ---
    hb = h_new.astype(jnp.bfloat16)
    scores = jnp.dot(hb, enc_hs, preferred_element_type=jnp.float32)        # (NB, S)
    m = jnp.max(scores, axis=-1, keepdims=True)
    e = jnp.exp(scores - m)
    attn = e / jnp.sum(e, axis=-1, keepdims=True)
    attn_b = attn.astype(jnp.bfloat16)
    context = jnp.dot(attn_b, enc_sh, preferred_element_type=jnp.float32)   # (NB, H)

    # --- fused output projection + pointer gate: ONE MXU pass ---
    # wo lanes [0:V] = [wout_h; wout_c; 0], lane OUT-1 = [wp_h; wp_c; wp_x]
    hcx = jnp.concatenate([h_new, context, x], axis=1).astype(jnp.bfloat16)  # (NB, 3H)
    proj = jnp.dot(hcx, wo_ref[...], preferred_element_type=jnp.float32)     # (NB, OUT)
    p_gen = jax.nn.sigmoid(proj[:, OUT - 1:OUT] + b[2:3, 0:1])               # (NB, 1)

    # vocab softmax over the full 256 lanes; bias row carries -1e30 mask on lanes >= V
    logits = proj + b[1:2, :]
    lm = jnp.max(logits, axis=-1, keepdims=True)
    le = jnp.exp(logits - lm)
    vdist = le / jnp.sum(le, axis=-1, keepdims=True)                          # (NB, OUT)

    # --- copy distribution: attn @ one_hot(ext_ids), bf16 operands, one MXU pass ---
    copy = jnp.dot(attn_b, oh_ref[0], preferred_element_type=jnp.float32)     # (NB, OUT)

    mix = p_gen * vdist + (1.0 - p_gen) * copy
    logp_ref[...] = jnp.log(mix)                          # exact log; zero mass -> -inf

    pad = state_ref.shape[1] - H
    state_ref[...] = jnp.concatenate(
        [h_new, jnp.zeros((NB, pad), jnp.float32)], axis=1)


def _decoder_step_pallas(xh, enc_sh, enc_hs, onehot, wg, wo, b):
    CB, two_h = xh.shape
    H = two_h // 2
    C, S, _ = enc_sh.shape
    BP = CB // C
    OUT = onehot.shape[2]
    kernel = functools.partial(_decoder_step_kernel, hidden=H)
    grid_spec = pltpu.PrefetchScalarGridSpec(
        num_scalar_prefetch=0,
        grid=(C,),
        in_specs=[
            pl.BlockSpec((BP, two_h), lambda c: (c, 0)),
            pl.BlockSpec((1, S, H), lambda c: (c, 0, 0)),
            pl.BlockSpec((1, H, S), lambda c: (c, 0, 0)),
            pl.BlockSpec((1, S, OUT), lambda c: (c, 0, 0)),
            pl.BlockSpec(wg.shape, lambda c: (0, 0)),
            pl.BlockSpec(wo.shape, lambda c: (0, 0)),
            pl.BlockSpec(b.shape, lambda c: (0, 0)),
        ],
        out_specs=(
            pl.BlockSpec((BP, OUT), lambda c: (c, 0)),
            pl.BlockSpec((BP, _LANES), lambda c: (c, 0)),
        ),
    )
    return pl.pallas_call(
        kernel,
        out_shape=(jax.ShapeDtypeStruct((CB, OUT), jnp.float32),   # log p over padded ext vocab
                   jax.ShapeDtypeStruct((CB, _LANES), jnp.float32)),  # h_new padded to 128 lanes
        grid_spec=grid_spec,
        compiler_params=pltpu.CompilerParams(
            dimension_semantics=("parallel",)),                    # both TCs on v7x
    )(xh, enc_sh, enc_hs, onehot, wg, wo, b)


# ---------------- weight packing (bf16 MXU slabs + f32 bias slab) ----------------
def pack_decoder_params(p):
    H = config.hidden_size
    V = config.vocab_size
    assert 4 * H <= _LANES, "fused-GRU packing assumes 4*H <= 128"
    assert V + 1 <= _OUT_W, "output-slab packing assumes V < 256"

    # fused GRU slab (2H, 128): rows [0:H] multiply x, rows [H:2H] multiply h_prev.
    wg = jnp.zeros((2 * H, _LANES), jnp.float32)
    wg = wg.at[0:H, 0:H].set(p['wxr'])
    wg = wg.at[0:H, H:2 * H].set(p['wxz'])
    wg = wg.at[0:H, 2 * H:3 * H].set(p['wxn'])
    wg = wg.at[H:2 * H, 0:H].set(p['whr'])
    wg = wg.at[H:2 * H, H:2 * H].set(p['whz'])
    wg = wg.at[H:2 * H, 3 * H:4 * H].set(p['whn'])

    # output-projection + pointer-gate slab (3H, 256)
    wo = jnp.zeros((3 * H, _OUT_W), jnp.float32)
    wo = wo.at[0:H, 0:V].set(p['wout_h'])
    wo = wo.at[H:2 * H, 0:V].set(p['wout_c'])
    wo = wo.at[0:H, _OUT_W - 1].set(p['wp_h'][0])
    wo = wo.at[H:2 * H, _OUT_W - 1].set(p['wp_c'][0])
    wo = wo.at[2 * H:3 * H, _OUT_W - 1].set(p['wp_x'][0])

    # bias slab (8, 256) f32
    b = jnp.zeros((_SUBLANES, _OUT_W), jnp.float32)
    b = b.at[0, 0:H].set(p['br'][0])
    b = b.at[0, H:2 * H].set(p['bz'][0])
    b = b.at[0, 2 * H:3 * H].set(p['bnx'][0])
    b = b.at[0, 3 * H:4 * H].set(p['bnh'][0])
    b = b.at[1, 0:V].set(p['bout'][0])
    b = b.at[1, V:].set(-1e30)            # softmax mask for lanes >= V (incl. pg lane)
    b = b.at[2, 0].set(p['bp'][0, 0])
    return wg.astype(jnp.bfloat16), wo.astype(jnp.bfloat16), b


# ---------------- full beam search on device (one dispatch, one host fetch) ----------------
@functools.partial(jax.jit, static_argnames=("v_ext",))
def _beam_search_device(h0, sec_vec, enc_sh, enc_hs, onehot, emb, wg, wo, b, *, v_ext):
    C, H = h0.shape
    B = config.beam_size
    BP = _PADDED_BEAMS
    T = config.MAX_LENGTH + 1
    V = config.vocab_size
    BB = B * B
    col = jnp.arange(C)

    beam_tokens = jnp.zeros((C, B, T), jnp.int32).at[:, :, 0].set(config.SOS_token)
    beam_logsum = jnp.zeros((C, B), jnp.float32)
    beam_hidden = jnp.broadcast_to(h0[:, None, :], (C, B, H))
    num_beams = jnp.full((C,), B, jnp.int32)
    res_tokens = jnp.zeros((C, B, T), jnp.int32)
    res_len = jnp.ones((C, B), jnp.int32)
    res_logsum = jnp.zeros((C, B), jnp.float32)
    res_count = jnp.zeros((C,), jnp.int32)

    def step_fn(step, carry):
        (beam_tokens, beam_logsum, beam_hidden, num_beams,
         res_tokens, res_len, res_logsum, res_count) = carry
        active = res_count < B                                          # (C,)

        # ---- decoder inputs for all columns x padded beams ----
        tok = beam_tokens[:, :, step]                                   # (C, B)
        tok = jnp.where(tok >= V, config.UNK_token, tok)
        tok = jnp.pad(tok, ((0, 0), (0, BP - B)),
                      constant_values=config.UNK_token)                 # (C, BP)
        x = emb[tok] + sec_vec[:, None, :]                              # (C, BP, H)
        h_in = jnp.pad(beam_hidden, ((0, 0), (0, BP - B), (0, 0)))      # (C, BP, H)
        xh = jnp.concatenate([x, h_in], axis=-1).reshape(C * BP, 2 * H)

        logp, h_state = _decoder_step_pallas(xh, enc_sh, enc_hs, onehot, wg, wo, b)
        logp = logp.reshape(C, BP, -1)[:, :B, :v_ext]                   # (C, B, v_ext)
        h_new = h_state.reshape(C, BP, -1)[:, :, :H]                    # (C, BP, H)

        topk_lp, topk_ids = jax.lax.top_k(logp, B)                      # (C, B, B)

        # ---- candidate pool (parents x top-k), reference iteration order (i, j) ----
        num_old = jnp.where(step == 0, 1, num_beams)                    # (C,)
        parent = jnp.broadcast_to(
            jnp.arange(B, dtype=jnp.int32)[None, :, None], (C, B, B))
        valid = parent < num_old[:, None, None]
        cand_lsum = beam_logsum[:, :, None] + topk_lp
        score = jnp.where(valid, cand_lsum, -jnp.inf).reshape(C, BB)
        token_f = topk_ids.reshape(C, BB)
        parent_f = parent.reshape(C, BB)
        lsum_f = cand_lsum.reshape(C, BB)
        valid_f = valid.reshape(C, BB)

        order = jnp.argsort(-score, axis=-1)                            # stable, descending
        token_s = jnp.take_along_axis(token_f, order, axis=-1)
        parent_s = jnp.take_along_axis(parent_f, order, axis=-1)
        lsum_s = jnp.take_along_axis(lsum_f, order, axis=-1)
        valid_s = jnp.take_along_axis(valid_f, order, axis=-1)

        # ---- reference "append / break" selection loop, vectorized via prefix counts ----
        eos_s = token_s == config.EOS_token
        e_int = eos_s.astype(jnp.int32)
        excl_eos = jnp.cumsum(e_int, axis=-1) - e_int                   # EOS before p
        pos = jnp.arange(BB, dtype=jnp.int32)[None, :]
        excl_non = pos - excl_eos                                       # non-EOS before p
        proc = valid_s & (excl_non < B) & ((res_count[:, None] + excl_eos) < B)
        proc_non = proc & jnp.logical_not(eos_s)
        proc_eos = proc & eos_s

        slots = jnp.arange(B, dtype=jnp.int32)[None, :, None]           # (1, B, 1)

        # surviving beams: processed non-EOS candidates in sorted order
        match_b = proc_non[:, None, :] & (excl_non[:, None, :] == slots)
        p_b = jnp.argmax(match_b, axis=-1)                              # (C, B)
        sel_tok = jnp.take_along_axis(token_s, p_b, axis=-1)
        sel_par = jnp.take_along_axis(parent_s, p_b, axis=-1)
        sel_lsum = jnp.take_along_axis(lsum_s, p_b, axis=-1)
        new_bt = beam_tokens[col[:, None], sel_par]                     # (C, B, T)
        new_bt = new_bt.at[:, :, step + 1].set(sel_tok)
        new_bh = h_new[col[:, None], sel_par]                           # (C, B, H)
        new_nb = jnp.sum(proc_non, axis=-1).astype(jnp.int32)

        # finished beams (EOS) appended to results
        tgt = res_count[:, None] + excl_eos
        match_r = proc_eos[:, None, :] & (tgt[:, None, :] == slots)
        p_r = jnp.argmax(match_r, axis=-1)
        found_r = jnp.any(match_r, axis=-1)                             # (C, B)
        r_tok = jnp.take_along_axis(token_s, p_r, axis=-1)
        r_par = jnp.take_along_axis(parent_s, p_r, axis=-1)
        r_lsum = jnp.take_along_axis(lsum_s, p_r, axis=-1)
        r_hist = beam_tokens[col[:, None], r_par]
        r_hist = r_hist.at[:, :, step + 1].set(r_tok)
        upd = found_r & active[:, None]
        res_tokens = jnp.where(upd[:, :, None], r_hist, res_tokens)
        res_logsum = jnp.where(upd, r_lsum, res_logsum)
        res_len = jnp.where(upd, step + 2, res_len)
        new_rc = res_count + jnp.sum(proc_eos, axis=-1).astype(jnp.int32)

        # columns that already collected beam_size results are frozen
        beam_tokens = jnp.where(active[:, None, None], new_bt, beam_tokens)
        beam_logsum = jnp.where(active[:, None], sel_lsum, beam_logsum)
        beam_hidden = jnp.where(active[:, None, None], new_bh, beam_hidden)
        num_beams = jnp.where(active, new_nb, num_beams)
        res_count = jnp.where(active, new_rc, res_count)
        return (beam_tokens, beam_logsum, beam_hidden, num_beams,
                res_tokens, res_len, res_logsum, res_count)

    carry = (beam_tokens, beam_logsum, beam_hidden, num_beams,
             res_tokens, res_len, res_logsum, res_count)
    carry = jax.lax.fori_loop(0, config.MAX_LENGTH, step_fn, carry)
    (beam_tokens, beam_logsum, _bh, num_beams,
     res_tokens, res_len, res_logsum, res_count) = carry

    # "if len(results) == 0: results = beams"
    fallback = res_count == 0
    cnt = jnp.where(fallback, num_beams, res_count)
    lsum = jnp.where(fallback[:, None], beam_logsum, res_logsum)
    lens = jnp.where(fallback[:, None], config.MAX_LENGTH + 1, res_len)
    toks = jnp.where(fallback[:, None, None], beam_tokens, res_tokens)
    avail = jnp.arange(config.beam_size, dtype=jnp.int32)[None, :] < cnt[:, None]
    avg = jnp.where(avail, lsum / lens.astype(jnp.float32), -jnp.inf)
    best = jnp.argmax(avg, axis=-1)                                     # (C,)
    best_tok = toks[col, best]                                          # (C, T)
    best_len = lens[col, best]                                          # (C,)
    best_avg = avg[col, best]                                           # (C,)
    return best_tok, best_len, best_avg


# ---------------- synthetic seq2seq pointer model (deterministic weights) ----------------
def init_params(key):
    H, V = config.hidden_size, config.vocab_size
    names_shapes = [
        ('embedding', (V, H)), ('w_enc', (H, H)), ('b_enc', (H,)),
        ('wxr', (H, H)), ('wxz', (H, H)), ('wxn', (H, H)),
        ('whr', (H, H)), ('whz', (H, H)), ('whn', (H, H)),
        ('br', (1, H)), ('bz', (1, H)), ('bnx', (1, H)), ('bnh', (1, H)),
        ('wout_h', (H, V)), ('wout_c', (H, V)), ('bout', (1, V)),
        ('wp_c', (1, H)), ('wp_h', (1, H)), ('wp_x', (1, H)), ('bp', (1, 1)),
    ]
    keys = jax.random.split(key, len(names_shapes))
    return {n: (0.1 * jax.random.normal(k, s)).astype(jnp.float32)
            for (n, s), k in zip(names_shapes, keys)}


class SyntheticPointerModel:
    """Stand-in for `self.model` used by BeamSearchDecoder (encode / decoder step)."""
    # TODO(synk): the reference's encoder/decoder submodule internals are not provided; this
    # is a deterministic synthetic pointer-generator step with the same interface & shapes.

    def __init__(self, params):
        self.params = params
        self.vocab_size = config.vocab_size
        self.wg_slab, self.wo_slab, self.b_slab = pack_decoder_params(params)

    def encode(self, data_batch):
        src = data_batch[0]                                      # (S, B) int32
        p = self.params
        emb = p['embedding'][src]                                # (S, B, H)
        encoder_outputs = jnp.tanh(jnp.dot(emb, p['w_enc']) + p['b_enc'])
        denom = jnp.arange(1, src.shape[0] + 1, dtype=jnp.float32)[:, None, None]
        encoder_hidden = jnp.tanh(jnp.cumsum(encoder_outputs, axis=0) / denom)  # (S, B, H)
        sec_hidden = encoder_hidden[-1:]                         # (1, B, H)
        return sec_hidden, encoder_outputs, encoder_hidden


# ---------------- BeamSearchDecoder ----------------
class BeamSearchDecoder:
    def __init__(self, model):
        self.model = model

    def sort_beams(self, beams):
        return sorted(beams, key=lambda h: h.avg_log_prob, reverse=True)

    def _device_beam_search(self, h0, sec_vec, enc_cols, ext_cols, max_oov_length):
        """Run the full MAX_LENGTH-step beam search for all columns on device."""
        v_ext = self.model.vocab_size + max_oov_length
        assert v_ext <= _OUT_W, "extended vocab must fit in the 256-lane output slab"
        enc_sh = enc_cols.astype(jnp.bfloat16)                              # (C, S, H)
        enc_hs = jnp.transpose(enc_cols, (0, 2, 1)).astype(jnp.bfloat16)    # (C, H, S)
        onehot = jax.nn.one_hot(ext_cols, _OUT_W, dtype=jnp.bfloat16)       # (C, S, 256)
        best_tok, best_len, best_avg = _beam_search_device(
            h0, sec_vec, enc_sh, enc_hs, onehot,
            self.model.params['embedding'],
            self.model.wg_slab, self.model.wo_slab, self.model.b_slab,
            v_ext=v_ext)
        best_tok = jax.device_get(best_tok)          # single host fetch for the search
        best_len = jax.device_get(best_len)
        best_avg = jax.device_get(best_avg)
        n_cols = best_tok.shape[0]
        all_tokens = [best_tok[c, 1:int(best_len[c])].tolist() for c in range(n_cols)]
        all_scores = [float(best_avg[c]) for c in range(n_cols)]
        return all_tokens, all_scores

    def forward(self, data_batch):
        sec_hidden, encoder_outputs, encoder_hidden = self.model.encode(data_batch)
        (_, _, _, _, batch_oovs, max_oov_length, extend_inp, *_rest) = data_batch
        # all encoder columns decoded in one device call (fills the padded rows)
        h0 = encoder_hidden[-1]                                 # (C, H); decoder_num_layers == 1
        sec_vec = sec_hidden[0]                                 # (C, H)
        enc_cols = jnp.transpose(encoder_outputs, (1, 0, 2))    # (C, S, H)
        ext_cols = jnp.transpose(extend_inp).astype(jnp.int32)  # (C, S)
        all_tokens, all_scores = self._device_beam_search(
            h0, sec_vec, enc_cols, ext_cols, max_oov_length)
        return all_tokens, all_scores, batch_oovs

    def beam_search(self, encoder_hidden, sec_hidden, encoder_outputs, max_oov_length, extend_inp):
        # single-column entry point, kept for API parity with the reference
        h0 = encoder_hidden[-1]                                 # (1, H)
        sec_vec = sec_hidden[0]                                 # (1, H)
        enc_cols = jnp.transpose(encoder_outputs, (1, 0, 2))    # (1, S, H)
        ext_cols = jnp.transpose(extend_inp).astype(jnp.int32)  # (1, S)
        tokens, scores = self._device_beam_search(
            h0, sec_vec, enc_cols, ext_cols, max_oov_length)
        return tokens[0], scores[0]


# ---------------- main ----------------
if __name__ == "__main__":
    key = jax.random.PRNGKey(0)
    pkey, skey, ekey = jax.random.split(key, 3)
    params = init_params(pkey)
    model = SyntheticPointerModel(params)
    bsd = BeamSearchDecoder(model)

    S, batch, max_oov = 8, 2, 8
    src = jax.random.randint(skey, (S, batch), 4, config.vocab_size, dtype=jnp.int32)
    extend_inp = jax.random.randint(ekey, (S, batch), 4, config.vocab_size + max_oov,
                                    dtype=jnp.int32)
    batch_oovs = [[f"oov_{i}"] for i in range(batch)]
    data_batch = (src, None, None, None, batch_oovs, max_oov, extend_inp,
                  None, None, None, None)

    # Direct kernel invocation: one decoder step for all columns x padded beams.
    C, BP, H = batch, _PADDED_BEAMS, config.hidden_size
    sec_hidden, encoder_outputs, encoder_hidden = model.encode(data_batch)
    enc_cols = jnp.transpose(encoder_outputs, (1, 0, 2))                  # (C, S, H)
    enc_sh = enc_cols.astype(jnp.bfloat16)
    enc_hs = jnp.transpose(enc_cols, (0, 2, 1)).astype(jnp.bfloat16)
    oh = jax.nn.one_hot(jnp.transpose(extend_inp).astype(jnp.int32), _OUT_W,
                        dtype=jnp.bfloat16)                               # (C, S, 256)
    x0 = params['embedding'][jnp.full((C, BP), config.SOS_token, jnp.int32)]
    x0 = x0 + sec_hidden[0][:, None, :]
    h_init = jnp.broadcast_to(encoder_hidden[-1][:, None, :], (C, BP, H))
    xh0 = jnp.concatenate([x0, h_init], axis=-1).reshape(C * BP, 2 * H)
    out = _decoder_step_pallas(xh0, enc_sh, enc_hs, oh,
                               model.wg_slab, model.wo_slab, model.b_slab)
    jax.block_until_ready(out)

    # Full beam-search forward (device-resident decode loop + beam selection).
    all_tokens, all_scores, _ = bsd.forward(data_batch)
    assert len(all_tokens) == batch and len(all_scores) == batch
    assert all(len(t) >= 1 for t in all_tokens)

    print("KERNEL_OK")
</pallas_src>

<mosaic_0001>
module attributes {stable_mosaic.version = 11 : i64} {
  func.func @_decoder_step_kernel(%arg0: i32, %arg1: memref<8x64xf32, #tpu.memory_space<vmem>>, %arg2: memref<1x8x32xbf16, #tpu.memory_space<vmem>>, %arg3: memref<1x32x8xbf16, #tpu.memory_space<vmem>>, %arg4: memref<1x8x256xbf16, #tpu.memory_space<vmem>>, %arg5: memref<64x128xbf16, #tpu.memory_space<vmem>>, %arg6: memref<96x256xbf16, #tpu.memory_space<vmem>>, %arg7: memref<8x256xf32, #tpu.memory_space<vmem>>, %arg8: memref<8x256xf32, #tpu.memory_space<vmem>>, %arg9: memref<8x128xf32, #tpu.memory_space<vmem>>) attributes {dimension_semantics = [#tpu.dimension_semantics<parallel>], iteration_bounds = array<i64: 2>, scalar_prefetch = 0 : i64, scratch_operands = 0 : i64, tpu.core_type = #tpu.core_type<tc>, window_params = [{transform_indices = @transform_0, window_bounds = array<i64: 8, 64>}, {transform_indices = @transform_1, window_bounds = array<i64: 1, 8, 32>}, {transform_indices = @transform_2, window_bounds = array<i64: 1, 32, 8>}, {transform_indices = @transform_3, window_bounds = array<i64: 1, 8, 256>}, {pipeline_mode = #tpu.pipeline_mode<synchronous>, transform_indices = @transform_4, window_bounds = array<i64: 64, 128>}, {pipeline_mode = #tpu.pipeline_mode<synchronous>, transform_indices = @transform_5, window_bounds = array<i64: 96, 256>}, {pipeline_mode = #tpu.pipeline_mode<synchronous>, transform_indices = @transform_6, window_bounds = array<i64: 8, 256>}, {transform_indices = @transform_7, window_bounds = array<i64: 8, 256>}, {transform_indices = @transform_8, window_bounds = array<i64: 8, 128>}]} {
    %c0 = arith.constant 0 : index
    %c0_0 = arith.constant 0 : index
    %0 = vector.load %arg1[%c0, %c0_0] : memref<8x64xf32, #tpu.memory_space<vmem>>, vector<8x64xf32>
    %1 = vector.extract_strided_slice %0 {offsets = [0, 0], sizes = [8, 32], strides = [1, 1]} : vector<8x64xf32> to vector<8x32xf32>
    %2 = vector.extract_strided_slice %0 {offsets = [0, 32], sizes = [8, 32], strides = [1, 1]} : vector<8x64xf32> to vector<8x32xf32>
    %c0_1 = arith.constant 0 : index
    %c0_2 = arith.constant 0 : index
    %c0_3 = arith.constant 0 : index
    %3 = vector.load %arg2[%c0_1, %c0_2, %c0_3] : memref<1x8x32xbf16, #tpu.memory_space<vmem>>, vector<1x8x32xbf16>
    %4 = vector.shape_cast %3 : vector<1x8x32xbf16> to vector<8x32xbf16>
    %c0_4 = arith.constant 0 : index
    %c0_5 = arith.constant 0 : index
    %c0_6 = arith.constant 0 : index
    %5 = vector.load %arg3[%c0_4, %c0_5, %c0_6] : memref<1x32x8xbf16, #tpu.memory_space<vmem>>, vector<1x32x8xbf16>
    %6 = vector.shape_cast %5 : vector<1x32x8xbf16> to vector<32x8xbf16>
    %c0_7 = arith.constant 0 : index
    %c0_8 = arith.constant 0 : index
    %7 = vector.load %arg7[%c0_7, %c0_8] : memref<8x256xf32, #tpu.memory_space<vmem>>, vector<8x256xf32>
    %8 = arith.truncf %0 : vector<8x64xf32> to vector<8x64xbf16>
    %c0_9 = arith.constant 0 : index
    %c0_10 = arith.constant 0 : index
    %9 = vector.load %arg5[%c0_9, %c0_10] : memref<64x128xbf16, #tpu.memory_space<vmem>>, vector<64x128xbf16>
    %cst = arith.constant dense<0.000000e+00> : vector<8x128xf32>
    %10 = tpu.matmul %8, %9, %cst {dimension_numbers = #tpu.dot_dimension_numbers<[1], [0], [0], [1], [0, 0, 1, 1], [], []>} : vector<8x64xbf16>, vector<64x128xbf16>, vector<8x128xf32> -> vector<8x128xf32>
    %11 = vector.extract_strided_slice %7 {offsets = [0, 0], sizes = [1, 128], strides = [1, 1]} : vector<8x256xf32> to vector<1x128xf32>
    %12 = vector.broadcast %11 : vector<1x128xf32> to vector<8x128xf32>
    %13 = arith.addf %10, %12 : vector<8x128xf32>
    %14 = vector.extract_strided_slice %13 {offsets = [0, 0], sizes = [8, 32], strides = [1, 1]} : vector<8x128xf32> to vector<8x32xf32>
    %15 = arith.negf %14 : vector<8x32xf32>
    %16 = math.exp %15 : vector<8x32xf32>
    %cst_11 = arith.constant 1.000000e+00 : f32
    %17 = vector.broadcast %cst_11 : f32 to vector<8x32xf32>
    %18 = arith.addf %17, %16 : vector<8x32xf32>
    %19 = arith.divf %17, %18 : vector<8x32xf32>
    %20 = vector.extract_strided_slice %13 {offsets = [0, 32], sizes = [8, 32], strides = [1, 1]} : vector<8x128xf32> to vector<8x32xf32>
    %21 = arith.negf %20 : vector<8x32xf32>
    %22 = math.exp %21 : vector<8x32xf32>
    %cst_12 = arith.constant 1.000000e+00 : f32
    %23 = vector.broadcast %cst_12 : f32 to vector<8x32xf32>
    %24 = arith.addf %23, %22 : vector<8x32xf32>
    %25 = arith.divf %23, %24 : vector<8x32xf32>
    %26 = vector.extract_strided_slice %13 {offsets = [0, 64], sizes = [8, 32], strides = [1, 1]} : vector<8x128xf32> to vector<8x32xf32>
    %27 = vector.extract_strided_slice %13 {offsets = [0, 96], sizes = [8, 32], strides = [1, 1]} : vector<8x128xf32> to vector<8x32xf32>
    %28 = arith.mulf %19, %27 : vector<8x32xf32>
    %29 = arith.addf %26, %28 : vector<8x32xf32>
    %30 = math.tanh %29 : vector<8x32xf32>
    %cst_13 = arith.constant 1.000000e+00 : f32
    %31 = vector.broadcast %cst_13 : f32 to vector<8x32xf32>
    %32 = arith.subf %31, %25 : vector<8x32xf32>
    %33 = arith.mulf %32, %30 : vector<8x32xf32>
    %34 = arith.mulf %25, %2 : vector<8x32xf32>
    %35 = arith.addf %33, %34 : vector<8x32xf32>
    %36 = arith.truncf %35 : vector<8x32xf32> to vector<8x32xbf16>
    %cst_14 = arith.constant dense<0.000000e+00> : vector<8x8xf32>
    %37 = tpu.matmul %36, %6, %cst_14 {dimension_numbers = #tpu.dot_dimension_numbers<[1], [0], [0], [1], [0, 0, 1, 1], [], []>} : vector<8x32xbf16>, vector<32x8xbf16>, vector<8x8xf32> -> vector<8x8xf32>
    %cst_15 = arith.constant dense<0xFF800000> : vector<8xf32>
    %38 = vector.multi_reduction <maximumf>, %37, %cst_15 [1] : vector<8x8xf32> to vector<8xf32>
    %39 = vector.shape_cast %38 : vector<8xf32> to vector<8x1xf32>
    %40 = vector.broadcast %39 : vector<8x1xf32> to vector<8x8xf32>
    %41 = arith.subf %37, %40 : vector<8x8xf32>
    %42 = math.exp %41 : vector<8x8xf32>
    %cst_16 = arith.constant dense<0.000000e+00> : vector<8xf32>
    %43 = vector.multi_reduction <add>, %42, %cst_16 [1] : vector<8x8xf32> to vector<8xf32>
    %44 = vector.shape_cast %43 : vector<8xf32> to vector<8x1xf32>
    %45 = vector.broadcast %44 : vector<8x1xf32> to vector<8x8xf32>
    %46 = arith.divf %42, %45 : vector<8x8xf32>
    %47 = arith.truncf %46 : vector<8x8xf32> to vector<8x8xbf16>
    %cst_17 = arith.constant dense<0.000000e+00> : vector<8x32xf32>
    %48 = tpu.matmul %47, %4, %cst_17 {dimension_numbers = #tpu.dot_dimension_numbers<[1], [0], [0], [1], [0, 0, 1, 1], [], []>} : vector<8x8xbf16>, vector<8x32xbf16>, vector<8x32xf32> -> vector<8x32xf32>
    %49 = tpu.concatenate %35, %48, %1 in 1 : vector<8x32xf32>, vector<8x32xf32>, vector<8x32xf32> -> vector<8x96xf32>
    %50 = arith.truncf %49 : vector<8x96xf32> to vector<8x96xbf16>
    %c0_18 = arith.constant 0 : index
    %c0_19 = arith.constant 0 : index
    %51 = vector.load %arg6[%c0_18, %c0_19] : memref<96x256xbf16, #tpu.memory_space<vmem>>, vector<96x256xbf16>
    %cst_20 = arith.constant dense<0.000000e+00> : vector<8x256xf32>
    %52 = tpu.matmul %50, %51, %cst_20 {dimension_numbers = #tpu.dot_dimension_numbers<[1], [0], [0], [1], [0, 0, 1, 1], [], []>} : vector<8x96xbf16>, vector<96x256xbf16>, vector<8x256xf32> -> vector<8x256xf32>
    %53 = vector.extract_strided_slice %52 {offsets = [0, 255], sizes = [8, 1], strides = [1, 1]} : vector<8x256xf32> to vector<8x1xf32>
    %54 = vector.extract_strided_slice %7 {offsets = [2, 0], sizes = [1, 1], strides = [1, 1]} : vector<8x256xf32> to vector<1x1xf32>
    %55 = vector.broadcast %54 : vector<1x1xf32> to vector<8x1xf32>
    %56 = arith.addf %53, %55 : vector<8x1xf32>
    %57 = arith.negf %56 : vector<8x1xf32>
    %58 = math.exp %57 : vector<8x1xf32>
    %cst_21 = arith.constant 1.000000e+00 : f32
    %59 = vector.broadcast %cst_21 : f32 to vector<8x1xf32>
    %60 = arith.addf %59, %58 : vector<8x1xf32>
    %61 = arith.divf %59, %60 : vector<8x1xf32>
    %62 = vector.extract_strided_slice %7 {offsets = [1, 0], sizes = [1, 256], strides = [1, 1]} : vector<8x256xf32> to vector<1x256xf32>
    %63 = vector.broadcast %62 : vector<1x256xf32> to vector<8x256xf32>
    %64 = arith.addf %52, %63 : vector<8x256xf32>
    %cst_22 = arith.constant dense<0xFF800000> : vector<8xf32>
    %65 = vector.multi_reduction <maximumf>, %64, %cst_22 [1] : vector<8x256xf32> to vector<8xf32>
    %66 = vector.shape_cast %65 : vector<8xf32> to vector<8x1xf32>
    %67 = vector.broadcast %66 : vector<8x1xf32> to vector<8x256xf32>
    %68 = arith.subf %64, %67 : vector<8x256xf32>
    %69 = math.exp %68 : vector<8x256xf32>
    %cst_23 = arith.constant dense<0.000000e+00> : vector<8xf32>
    %70 = vector.multi_reduction <add>, %69, %cst_23 [1] : vector<8x256xf32> to vector<8xf32>
    %71 = vector.shape_cast %70 : vector<8xf32> to vector<8x1xf32>
    %72 = vector.broadcast %71 : vector<8x1xf32> to vector<8x256xf32>
    %73 = arith.divf %69, %72 : vector<8x256xf32>
    %c0_24 = arith.constant 0 : index
    %c0_25 = arith.constant 0 : index
    %c0_26 = arith.constant 0 : index
    %74 = vector.load %arg4[%c0_24, %c0_25, %c0_26] : memref<1x8x256xbf16, #tpu.memory_space<vmem>>, vector<1x8x256xbf16>
    %75 = vector.shape_cast %74 : vector<1x8x256xbf16> to vector<8x256xbf16>
    %cst_27 = arith.constant dense<0.000000e+00> : vector<8x256xf32>
    %76 = tpu.matmul %47, %75, %cst_27 {dimension_numbers = #tpu.dot_dimension_numbers<[1], [0], [0], [1], [0, 0, 1, 1], [], []>} : vector<8x8xbf16>, vector<8x256xbf16>, vector<8x256xf32> -> vector<8x256xf32>
    %77 = vector.broadcast %61 : vector<8x1xf32> to vector<8x256xf32>
    %78 = arith.mulf %77, %73 : vector<8x256xf32>
    %cst_28 = arith.constant 1.000000e+00 : f32
    %79 = vector.broadcast %cst_28 : f32 to vector<8x1xf32>
    %80 = arith.subf %79, %61 : vector<8x1xf32>
    %81 = vector.broadcast %80 : vector<8x1xf32> to vector<8x256xf32>
    %82 = arith.mulf %81, %76 : vector<8x256xf32>
    %83 = arith.addf %78, %82 : vector<8x256xf32>
    %84 = math.log %83 : vector<8x256xf32>
    %c0_29 = arith.constant 0 : index
    %c0_30 = arith.constant 0 : index
    %85 = vector.load %arg8[%c0_29, %c0_30] : memref<8x256xf32, #tpu.memory_space<vmem>>, vector<8x256xf32>
    tpu.vector_store %arg8[%c0_29, %c0_30], %84 {strides = array<i32>} : memref<8x256xf32, #tpu.memory_space<vmem>>, vector<8x256xf32>,
    %cst_31 = arith.constant 0.000000e+00 : f32
    %86 = vector.broadcast %cst_31 : f32 to vector<8x96xf32>
    %87 = tpu.concatenate %35, %86 in 1 : vector<8x32xf32>, vector<8x96xf32> -> vector<8x128xf32>
    %c0_32 = arith.constant 0 : index
    %c0_33 = arith.constant 0 : index
    %88 = vector.load %arg9[%c0_32, %c0_33] : memref<8x128xf32, #tpu.memory_space<vmem>>, vector<8x128xf32>
    tpu.vector_store %arg9[%c0_32, %c0_33], %87 {strides = array<i32>} : memref<8x128xf32, #tpu.memory_space<vmem>>, vector<8x128xf32>,
    return
  }
  func.func @transform_0(%arg0: i32) -> (i32, i32) {
    %c0_i32 = arith.constant 0 : i32
    %c0_i32_0 = arith.constant 0 : i32
    return %arg0, %c0_i32 : i32, i32
  }
  func.func @transform_1(%arg0: i32) -> (i32, i32, i32) {
    %c0_i32 = arith.constant 0 : i32
    %c0_i32_0 = arith.constant 0 : i32
    %c0_i32_1 = arith.constant 0 : i32
    return %arg0, %c0_i32, %c0_i32_0 : i32, i32, i32
  }
  func.func @transform_2(%arg0: i32) -> (i32, i32, i32) {
    %c0_i32 = arith.constant 0 : i32
    %c0_i32_0 = arith.constant 0 : i32
    %c0_i32_1 = arith.constant 0 : i32
    return %arg0, %c0_i32, %c0_i32_0 : i32, i32, i32
  }
  func.func @transform_3(%arg0: i32) -> (i32, i32, i32) {
    %c0_i32 = arith.constant 0 : i32
    %c0_i32_0 = arith.constant 0 : i32
    %c0_i32_1 = arith.constant 0 : i32
    return %arg0, %c0_i32, %c0_i32_0 : i32, i32, i32
  }
  func.func @transform_4(%arg0: i32) -> (i32, i32) {
    %c0_i32 = arith.constant 0 : i32
    %c0_i32_0 = arith.constant 0 : i32
    %c0_i32_1 = arith.constant 0 : i32
    return %c0_i32, %c0_i32_0 : i32, i32
  }
  func.func @transform_5(%arg0: i32) -> (i32, i32) {
    %c0_i32 = arith.constant 0 : i32
    %c0_i32_0 = arith.constant 0 : i32
    %c0_i32_1 = arith.constant 0 : i32
    return %c0_i32, %c0_i32_0 : i32, i32
  }
  func.func @transform_6(%arg0: i32) -> (i32, i32) {
    %c0_i32 = arith.constant 0 : i32
    %c0_i32_0 = arith.constant 0 : i32
    %c0_i32_1 = arith.constant 0 : i32
    return %c0_i32, %c0_i32_0 : i32, i32
  }
  func.func @transform_7(%arg0: i32) -> (i32, i32) {
    %c0_i32 = arith.constant 0 : i32
    %c0_i32_0 = arith.constant 0 : i32
    return %arg0, %c0_i32 : i32, i32
  }
  func.func @transform_8(%arg0: i32) -> (i32, i32) {
    %c0_i32 = arith.constant 0 : i32
    %c0_i32_0 = arith.constant 0 : i32
    return %arg0, %c0_i32 : i32, i32
  }
}

</mosaic_0001>

<llo_original>
// kernel: tpu_custom_call.1
$region0: #{tpu_custom_call.1}
  #allocation0 [shape = 'u32[]', space=smem, size = 0x4, offset = 0x4, fixed_abs, tag = 'smem constant byte address 0x4 - core index']
  #allocation1 [shape = 'u32[144,128]{1,0:T(1,128)}', space=vmem, size = 0x12000, scoped, tag = 'internal scratch']
  %s0 = inlined_call_operand.vmem [shape: f32[16,64], index: 0, kind: input, shape index: {}]
  %s1 = inlined_call_operand.hbm [shape: bf16[2,8,32], index: 1, kind: input, shape index: {}]
  %s2 = inlined_call_operand.vmem [shape: bf16[2,32,8], index: 2, kind: input, shape index: {}]
  %s3 = inlined_call_operand.hbm [shape: bf16[2,8,256], index: 3, kind: input, shape index: {}]
  %s4 = inlined_call_operand.vmem [shape: bf16[64,128], index: 4, kind: input, shape index: {}]
  %s5 = inlined_call_operand.hbm [shape: bf16[96,256], index: 5, kind: input, shape index: {}]
  %s6 = inlined_call_operand.hbm [shape: f32[8,256], index: 6, kind: input, shape index: {}]
  %s7 = inlined_call_operand.hbm [shape: f32[16,256], index: 7, kind: output, shape index: {0}]
  %s8 = inlined_call_operand.hbm [shape: f32[16,128], index: 8, kind: output, shape index: {1}]
  %9 = xla_tuple %s7, %s8
  %s10 = sld [smem:[#allocation0]]
  $region85: #{tpu_custom_call.1} parent=0
    _
  %s12 = ssub.s32 1, %s10
  %s13 = scalar_select 0, %s12, %s10
  $region1: #{tpu_custom_call.1} parent=0
    #allocation2 [shape = 'u8[4096]{0}', space=vmem, size = 0x1000, scoped, tag = 'input window, operand 1']
    #allocation3 [shape = 's32[2]{0}', space=sflag, size = 0x8, scoped, tag = 'scoped memory for tpu_custom_call.1']
    #allocation4 [shape = 's32[2]{0}', space=sflag, size = 0x8, scoped, tag = 'scoped memory for tpu_custom_call.1']
    #allocation5 [shape = 'u8[8192]{0}', space=vmem, size = 0x2000, scoped, tag = 'input window, operand 3']
    #allocation6 [shape = 's32[2]{0}', space=sflag, size = 0x8, scoped, tag = 'scoped memory for tpu_custom_call.1']
    #allocation7 [shape = 'u8[49152]{0}', space=vmem, size = 0xc000, scoped, tag = 'input window, operand 5, single buffered']
    #allocation8 [shape = 'u8[8192]{0}', space=vmem, size = 0x2000, scoped, tag = 'input window, operand 6, single buffered']
    #allocation9 [shape = 's32[1]{0}', space=sflag, size = 0x4, scoped, tag = 'scoped memory for tpu_custom_call.1']
    #allocation10 [shape = 'u8[16384]{0}', space=vmem, size = 0x4000, scoped, tag = 'output window, operand 0']
    #allocation11 [shape = 'u8[8192]{0}', space=vmem, size = 0x2000, scoped, tag = 'output window, operand 1']
    #allocation12 [shape = 's32[2]{0}', space=sflag, size = 0x8, scoped, tag = 'scoped memory for tpu_custom_call.1']
    %14 = vsyncpa [#allocation3], 0
    %s15 = scalar_lea.sflag [#allocation3], 1
    %16 = vsyncpa %s15, 0
    %17 = vsyncpa [#allocation6], 0
    %s18 = scalar_lea.sflag [#allocation6], 1
    %19 = vsyncpa %s18, 0
    %20 = vsyncpa [#allocation9], 0
    %21 = vsyncpa [#allocation4], 0
    %s22 = scalar_lea.sflag [#allocation4], 1
    %23 = vsyncpa %s22, 0
    %24 = vsyncpa [#allocation12], 0
    %s25 = scalar_lea.sflag [#allocation12], 1
    %26 = vsyncpa %s25, 0
    loop: start=0, step=1, limit=4
    $region2: #{tpu_custom_call.1} parent=1 // loop_pre_header
      _
    $region3: #{tpu_custom_call.1} parent=1 // loop_header
      %s28 = sphi 0, %s32
      %p29 = scmp.ge.s32.totalorder %s28, 4
      %s38 = sphi 0, %s40
      %s41 = sphi 0, %s38
      %s42 = sphi 0, %s41
      %s58 = sphi 0, %s42
      %s64 = sphi 0, %s66
      %s67 = sphi 0, %s64
      %s68 = sphi 0, %s67
      %s84 = sphi 0, %s68
      %s90 = sphi 0, %s92
      %s93 = sphi 0, %s90
      %s94 = sphi 0, %s93
      %s110 = sphi 0, %s94
      %s116 = sphi 0, %s118
      %s119 = sphi 0, %s116
      %s120 = sphi 0, %s119
      %s136 = sphi 0, %s120
      %s140 = sphi 0, %s140
      %s142 = sphi 0, %s140
      %s143 = sphi 0, %s142
      %s157 = sphi 0, %s143
      %s161 = sphi 0, %s161
      %s163 = sphi 0, %s161
      %s164 = sphi 0, %s163
      %s178 = sphi 0, %s164
      %s182 = sphi 0, %s182
      %s184 = sphi 0, %s182
      %s185 = sphi 0, %s184
      %s199 = sphi 0, %s185
      %s205 = sphi 0, %s207
      %s208 = sphi 0, %s205
      %s209 = sphi 0, %s208
      %s225 = sphi 0, %s209
      %s231 = sphi 0, %s233
      %s234 = sphi 0, %s231
      %s235 = sphi 0, %s234
      %s251 = sphi 0, %s235
    $region4: #{tpu_custom_call.1} parent=1 // loop_header_branch
      %31 = sbr.rel (%p29) target = $region8
    $region5: #{tpu_custom_call.1} parent=1 // loop_body
      %s33 = ssub.s32 %s28, 1
      %s34 = ssub.s32 %s28, 2
      %s35 = sadd.s32 %s28, 1
      %s36 = ssub.s32 %s28, %s35
      %p37 = scmp.eq.s32.totalorder %s36, 0
      %s39 = sadd.s32 %s38, 1
      %s40 = scalar_select %p37, %s38, %s39
      %p43 = pneg %p37
      %p44 = scmp.eq.s32.totalorder %s28, 1
      %p45 = por %p43, %p44
      %p46 = scmp.ne.s32.totalorder %s38, %s41
      %p47 = scmp.eq.s32.totalorder %s28, 0
      %p48 = por %p46, %p47
      %p49 = scmp.ne.s32.totalorder %s38, %s41
      %p50 = scmp.eq.s32.totalorder %s33, 1
      %p51 = por %p49, %p50
      %p52 = scmp.ne.s32.totalorder %s41, %s42
      %p53 = scmp.eq.s32.totalorder %s33, 0
      %p54 = por %p52, %p53
      %p55 = scmp.ne.s32.totalorder %s41, %s42
      %p56 = scmp.eq.s32.totalorder %s34, 1
      %p57 = por %p55, %p56
      %p59 = scmp.ne.s32.totalorder %s42, %s58
      %p60 = scmp.eq.s32.totalorder %s34, 0
      %p61 = por %p59, %p60
      %s62 = ssub.s32 %s28, %s35
      %p63 = scmp.eq.s32.totalorder %s62, 0
      %s65 = sadd.s32 %s64, 1
      %s66 = scalar_select %p63, %s64, %s65
      %p69 = pneg %p63
      %p70 = scmp.eq.s32.totalorder %s28, 1
      %p71 = por %p69, %p70
      %p72 = scmp.ne.s32.totalorder %s64, %s67
      %p73 = scmp.eq.s32.totalorder %s28, 0
      %p74 = por %p72, %p73
      %p75 = scmp.ne.s32.totalorder %s64, %s67
      %p76 = scmp.eq.s32.totalorder %s33, 1
      %p77 = por %p75, %p76
      %p78 = scmp.ne.s32.totalorder %s67, %s68
      %p79 = scmp.eq.s32.totalorder %s33, 0
      %p80 = por %p78, %p79
      %p81 = scmp.ne.s32.totalorder %s67, %s68
      %p82 = scmp.eq.s32.totalorder %s34, 1
      %p83 = por %p81, %p82
      %p85 = scmp.ne.s32.totalorder %s68, %s84
      %p86 = scmp.eq.s32.totalorder %s34, 0
      %p87 = por %p85, %p86
      %s88 = ssub.s32 %s28, %s35
      %p89 = scmp.eq.s32.totalorder %s88, 0
      %s91 = sadd.s32 %s90, 1
      %s92 = scalar_select %p89, %s90, %s91
      %p95 = pneg %p89
      %p96 = scmp.eq.s32.totalorder %s28, 1
      %p97 = por %p95, %p96
      %p98 = scmp.ne.s32.totalorder %s90, %s93
      %p99 = scmp.eq.s32.totalorder %s28, 0
      %p100 = por %p98, %p99
      %p101 = scmp.ne.s32.totalorder %s90, %s93
      %p102 = scmp.eq.s32.totalorder %s33, 1
      %p103 = por %p101, %p102
      %p104 = scmp.ne.s32.totalorder %s93, %s94
      %p105 = scmp.eq.s32.totalorder %s33, 0
      %p106 = por %p104, %p105
      %p107 = scmp.ne.s32.totalorder %s93, %s94
      %p108 = scmp.eq.s32.totalorder %s34, 1
      %p109 = por %p107, %p108
      %p111 = scmp.ne.s32.totalorder %s94, %s110
      %p112 = scmp.eq.s32.totalorder %s34, 0
      %p113 = por %p111, %p112
      %s114 = ssub.s32 %s28, %s35
      %p115 = scmp.eq.s32.totalorder %s114, 0
      %s117 = sadd.s32 %s116, 1
      %s118 = scalar_select %p115, %s116, %s117
      %p121 = pneg %p115
      %p122 = scmp.eq.s32.totalorder %s28, 1
      %p123 = por %p121, %p122
      %p124 = scmp.ne.s32.totalorder %s116, %s119
      %p125 = scmp.eq.s32.totalorder %s28, 0
      %p126 = por %p124, %p125
      %p127 = scmp.ne.s32.totalorder %s116, %s119
      %p128 = scmp.eq.s32.totalorder %s33, 1
      %p129 = por %p127, %p128
      %p130 = scmp.ne.s32.totalorder %s119, %s120
      %p131 = scmp.eq.s32.totalorder %s33, 0
      %p132 = por %p130, %p131
      %p133 = scmp.ne.s32.totalorder %s119, %s120
      %p134 = scmp.eq.s32.totalorder %s34, 1
      %p135 = por %p133, %p134
      %p137 = scmp.ne.s32.totalorder %s120, %s136
      %p138 = scmp.eq.s32.totalorder %s34, 0
      %p139 = por %p137, %p138
      %s141 = sadd.s32 %s140, 1
      %p144 = scmp.eq.s32.totalorder %s28, 1
      %p145 = scmp.ne.s32.totalorder %s140, %s142
      %p146 = scmp.eq.s32.totalorder %s28, 0
      %p147 = por %p145, %p146
      %p148 = scmp.ne.s32.totalorder %s140, %s142
      %p149 = scmp.eq.s32.totalorder %s33, 1
      %p150 = por %p148, %p149
      %p151 = scmp.ne.s32.totalorder %s142, %s143
      %p152 = scmp.eq.s32.totalorder %s33, 0
      %p153 = por %p151, %p152
      %p154 = scmp.ne.s32.totalorder %s142, %s143
      %p155 = scmp.eq.s32.totalorder %s34, 1
      %p156 = por %p154, %p155
      %p158 = scmp.ne.s32.totalorder %s143, %s157
      %p159 = scmp.eq.s32.totalorder %s34, 0
      %p160 = por %p158, %p159
      %s162 = sadd.s32 %s161, 1
      %p165 = scmp.eq.s32.totalorder %s28, 1
      %p166 = scmp.ne.s32.totalorder %s161, %s163
      %p167 = scmp.eq.s32.totalorder %s28, 0
      %p168 = por %p166, %p167
      %p169 = scmp.ne.s32.totalorder %s161, %s163
      %p170 = scmp.eq.s32.totalorder %s33, 1
      %p171 = por %p169, %p170
      %p172 = scmp.ne.s32.totalorder %s163, %s164
      %p173 = scmp.eq.s32.totalorder %s33, 0
      %p174 = por %p172, %p173
      %p175 = scmp.ne.s32.totalorder %s163, %s164
      %p176 = scmp.eq.s32.totalorder %s34, 1
      %p177 = por %p175, %p176
      %p179 = scmp.ne.s32.totalorder %s164, %s178
      %p180 = scmp.eq.s32.totalorder %s34, 0
      %p181 = por %p179, %p180
      %s183 = sadd.s32 %s182, 1
      %p186 = scmp.eq.s32.totalorder %s28, 1
      %p187 = scmp.ne.s32.totalorder %s182, %s184
      %p188 = scmp.eq.s32.totalorder %s28, 0
      %p189 = por %p187, %p188
      %p190 = scmp.ne.s32.totalorder %s182, %s184
      %p191 = scmp.eq.s32.totalorder %s33, 1
      %p192 = por %p190, %p191
      %p193 = scmp.ne.s32.totalorder %s184, %s185
      %p194 = scmp.eq.s32.totalorder %s33, 0
      %p195 = por %p193, %p194
      %p196 = scmp.ne.s32.totalorder %s184, %s185
      %p197 = scmp.eq.s32.totalorder %s34, 1
      %p198 = por %p196, %p197
      %p200 = scmp.ne.s32.totalorder %s185, %s199
      %p201 = scmp.eq.s32.totalorder %s34, 0
      %p202 = por %p200, %p201
      %s203 = ssub.s32 %s28, %s35
      %p204 = scmp.eq.s32.totalorder %s203, 0
      %s206 = sadd.s32 %s205, 1
      %s207 = scalar_select %p204, %s205, %s206
      %p210 = pneg %p204
      %p211 = scmp.eq.s32.totalorder %s28, 1
      %p212 = por %p210, %p211
      %p213 = scmp.ne.s32.totalorder %s205, %s208
      %p214 = scmp.eq.s32.totalorder %s28, 0
      %p215 = por %p213, %p214
      %p216 = scmp.ne.s32.totalorder %s205, %s208
      %p217 = scmp.eq.s32.totalorder %s33, 1
      %p218 = por %p216, %p217
      %p219 = scmp.ne.s32.totalorder %s208, %s209
      %p220 = scmp.eq.s32.totalorder %s33, 0
      %p221 = por %p219, %p220
      %p222 = scmp.ne.s32.totalorder %s208, %s209
      %p223 = scmp.eq.s32.totalorder %s34, 1
      %p224 = por %p222, %p223
      %p226 = scmp.ne.s32.totalorder %s209, %s225
      %p227 = scmp.eq.s32.totalorder %s34, 0
      %p228 = por %p226, %p227
      %s229 = ssub.s32 %s28, %s35
      %p230 = scmp.eq.s32.totalorder %s229, 0
      %s232 = sadd.s32 %s231, 1
      %s233 = scalar_select %p230, %s231, %s232
      %p236 = pneg %p230
      %p237 = scmp.eq.s32.totalorder %s28, 1
      %p238 = por %p236, %p237
      %p239 = scmp.ne.s32.totalorder %s231, %s234
      %p240 = scmp.eq.s32.totalorder %s28, 0
      %p241 = por %p239, %p240
      %p242 = scmp.ne.s32.totalorder %s231, %s234
      %p243 = scmp.eq.s32.totalorder %s33, 1
      %p244 = por %p242, %p243
      %p245 = scmp.ne.s32.totalorder %s234, %s235
      %p246 = scmp.eq.s32.totalorder %s33, 0
      %p247 = por %p245, %p246
      %p248 = scmp.ne.s32.totalorder %s234, %s235
      %p249 = scmp.eq.s32.totalorder %s34, 1
      %p250 = por %p248, %p249
      %p252 = scmp.ne.s32.totalorder %s235, %s251
      %p253 = scmp.eq.s32.totalorder %s34, 0
      %p254 = por %p252, %p253
      %p255 = scmp.le.s32.totalorder 1, %s28
      %p256 = scmp.lt.s32.totalorder %s28, 3
      %p257 = pnand %p255, %p256
      %p258 = pneg %p257
      // Predicated region
      $region9: #{tpu_custom_call.1} parent=5 // pred_check
        _
      $region10: #{tpu_custom_call.1} parent=5 // pred_check_branch
        %260 = sbr.rel (%p257) target = $region12
      $region11: #{tpu_custom_call.1} parent=5 // pred_region
        %s261 = ssub.s32 %s28, 1
        // Predicated region
        $region13: #{tpu_custom_call.1} parent=11 // pred_check
          %p262 = pneg %p153
        $region14: #{tpu_custom_call.1} parent=11 // pred_check_branch
          %264 = sbr.rel (%p262) target = $region16
        $region15: #{tpu_custom_call.1} parent=11 // pred_region
          _
        $region16: #{tpu_custom_call.1} parent=11 // pred_fallthru
          _
        // Predicated region
        $region17: #{tpu_custom_call.1} parent=11 // pred_check
          %p265 = pneg %p174
        $region18: #{tpu_custom_call.1} parent=11 // pred_check_branch
          %267 = sbr.rel (%p265) target = $region20
        $region19: #{tpu_custom_call.1} parent=11 // pred_region
          %s269 = ssub.s32 1536, 1536
          %270 = vsyncadd [#allocation6], %s269
          %s271 = sshll.u32 [#allocation7], 4
          %s272 = int_to_ptr.vmem [resolvable:$true] %s271
          %277 = dma.hbm_to_vmem [thread:$0]  %s5, 1536, %s272, [#allocation6], 128, 128, 8
        $region20: #{tpu_custom_call.1} parent=11 // pred_fallthru
          _
        // Predicated region
        $region21: #{tpu_custom_call.1} parent=11 // pred_check
          %p278 = pneg %p195
        $region22: #{tpu_custom_call.1} parent=11 // pred_check_branch
          %280 = sbr.rel (%p278) target = $region24
        $region23: #{tpu_custom_call.1} parent=11 // pred_region
          %s282 = ssub.s32 256, 256
          %283 = vsyncadd [#allocation9], %s282
          %s285 = sshll.u32 [#allocation8], 4
          %s286 = int_to_ptr.vmem [resolvable:$true] %s285
          %288 = dma.hbm_to_vmem [thread:$0]  %s6, 256, %s286, [#allocation9]
        $region24: #{tpu_custom_call.1} parent=11 // pred_fallthru
          _
      $region12: #{tpu_custom_call.1} parent=5 // pred_fallthru
        _
      %p289 = scmp.lt.s32.totalorder %s28, 2
      // Predicated region
      $region25: #{tpu_custom_call.1} parent=5 // pred_check
        %p290 = pneg %p289
      $region26: #{tpu_custom_call.1} parent=5 // pred_check_branch
        %292 = sbr.rel (%p290) target = $region28
      $region27: #{tpu_custom_call.1} parent=5 // pred_region
        // Predicated region
        $region29: #{tpu_custom_call.1} parent=27 // pred_check
          %p293 = pneg %p48
        $region30: #{tpu_custom_call.1} parent=27 // pred_check_branch
          %295 = sbr.rel (%p293) target = $region32
        $region31: #{tpu_custom_call.1} parent=27 // pred_region
          %p296 = scmp.lt.s32.totalorder %s28, 1
          %s297 = scalar_select %p296, %s28, 1
          %s298 = smul.addr %s297, 8
          %s299 = scalar_lea.vmem %s0, %s298
        $region32: #{tpu_custom_call.1} parent=27 // pred_fallthru
          _
        // Predicated region
        $region33: #{tpu_custom_call.1} parent=27 // pred_check
          %p300 = pneg %p74
        $region34: #{tpu_custom_call.1} parent=27 // pred_check_branch
          %302 = sbr.rel (%p300) target = $region36
        $region35: #{tpu_custom_call.1} parent=27 // pred_region
          %s303 = sand.u32 %s64, 1
          %s304 = scalar_lea.sflag [#allocation3], %s303
          %s305 = sand.u32 %s64, 1
          %s306 = smul.addr %s305, 4
          %s307 = scalar_lea.vmem [#allocation2], %s306
          %s309 = ssub.s32 64, 64
          %310 = vsyncadd %s304, %s309
          %s311 = smul.addr %s28, 64
          %s312 = scalar_lea.hbm %s1, %s311
          %s314 = sshll.u32 %s307, 4
          %s315 = int_to_ptr.vmem [resolvable:$true] %s314
          %317 = dma.hbm_to_vmem [thread:$0]  %s312, 64, %s315, %s304
        $region36: #{tpu_custom_call.1} parent=27 // pred_fallthru
          _
        // Predicated region
        $region37: #{tpu_custom_call.1} parent=27 // pred_check
          %p318 = pneg %p100
        $region38: #{tpu_custom_call.1} parent=27 // pred_check_branch
          %320 = sbr.rel (%p318) target = $region40
        $region39: #{tpu_custom_call.1} parent=27 // pred_region
          %p321 = scmp.lt.s32.totalorder %s28, 1
          %s322 = scalar_select %p321, %s28, 1
          %s323 = smul.addr %s322, 4
          %s324 = smul.addr %s323, 4
          %s325 = scalar_lea.vmem %s2, %s324
        $region40: #{tpu_custom_call.1} parent=27 // pred_fallthru
          _
        // Predicated region
        $region41: #{tpu_custom_call.1} parent=27 // pred_check
          %p326 = pneg %p126
        $region42: #{tpu_custom_call.1} parent=27 // pred_check_branch
          %328 = sbr.rel (%p326) target = $region44
        $region43: #{tpu_custom_call.1} parent=27 // pred_region
          %s329 = sand.u32 %s28, 1
          %s330 = scalar_lea.sflag [#allocation6], %s329
          %s331 = sand.u32 %s116, 1
          %s332 = smul.addr %s331, 8
          %s333 = scalar_lea.vmem [#allocation5], %s332
          %s335 = ssub.s32 128, 128
          %336 = vsyncadd %s330, %s335
          %s337 = smul.addr %s28, 2
          %s338 = smul.addr %s337, 64
          %s339 = scalar_lea.hbm %s3, %s338
          %s341 = sshll.u32 %s333, 4
          %s342 = int_to_ptr.vmem [resolvable:$true] %s341
          %344 = dma.hbm_to_vmem [thread:$0]  %s339, 128, %s342, %s330
        $region44: #{tpu_custom_call.1} parent=27 // pred_fallthru
          _
      $region28: #{tpu_custom_call.1} parent=5 // pred_fallthru
        _
      %p345 = scmp.le.s32.totalorder 1, %s28
      %p346 = scmp.lt.s32.totalorder %s28, 3
      %p347 = pnand %p345, %p346
      %p348 = pneg %p347
      // Predicated region
      $region45: #{tpu_custom_call.1} parent=5 // pred_check
        _
      $region46: #{tpu_custom_call.1} parent=5 // pred_check_branch
        %350 = sbr.rel (%p347) target = $region48
      $region47: #{tpu_custom_call.1} parent=5 // pred_region
        %s351 = ssub.s32 %s28, 1
        %s352 = sand.u32 %s67, 1
        %s353 = scalar_lea.sflag [#allocation3], %s352
        %s354 = sand.u32 %s67, 1
        %s355 = smul.addr %s354, 4
        %s356 = scalar_lea.vmem [#allocation2], %s355
        // Predicated region
        $region49: #{tpu_custom_call.1} parent=47 // pred_check
          %p357 = pneg %p80
        $region50: #{tpu_custom_call.1} parent=47 // pred_check_branch
          %359 = sbr.rel (%p357) target = $region52
        $region51: #{tpu_custom_call.1} parent=47 // pred_region
          %360 = dma.done %s353, 64
        $region52: #{tpu_custom_call.1} parent=47 // pred_fallthru
          _
        %s361 = sand.u32 %s33, 1
        %s362 = scalar_lea.sflag [#allocation6], %s361
        %s363 = sand.u32 %s119, 1
        %s364 = smul.addr %s363, 8
        %s365 = scalar_lea.vmem [#allocation5], %s364
        // Predicated region
        $region53: #{tpu_custom_call.1} parent=47 // pred_check
          %p366 = pneg %p132
        $region54: #{tpu_custom_call.1} parent=47 // pred_check_branch
          %368 = sbr.rel (%p366) target = $region56
        $region55: #{tpu_custom_call.1} parent=47 // pred_region
          %369 = dma.done %s362, 128
        $region56: #{tpu_custom_call.1} parent=47 // pred_fallthru
          _
        // Predicated region
        $region57: #{tpu_custom_call.1} parent=47 // pred_check
          %p370 = pneg %p174
        $region58: #{tpu_custom_call.1} parent=47 // pred_check_branch
          %372 = sbr.rel (%p370) target = $region60
        $region59: #{tpu_custom_call.1} parent=47 // pred_region
          %373 = dma.done [#allocation6], 1536
        $region60: #{tpu_custom_call.1} parent=47 // pred_fallthru
          _
        // Predicated region
        $region61: #{tpu_custom_call.1} parent=47 // pred_check
          %p374 = pneg %p195
        $region62: #{tpu_custom_call.1} parent=47 // pred_check_branch
          %376 = sbr.rel (%p374) target = $region64
        $region63: #{tpu_custom_call.1} parent=47 // pred_region
          %377 = dma.done [#allocation9], 256
        $region64: #{tpu_custom_call.1} parent=47 // pred_fallthru
          _
        %p378 = scmp.lt.s32.totalorder %s33, 1
        %s379 = scalar_select %p378, %s33, 1
        %s380 = smul.addr %s379, 8
        %s381 = scalar_lea.vmem %s0, %s380
        %p382 = pneg %p54
        %p383 = pneg %p51
        %s384 = sand.u32 %s67, 1
        %s385 = scalar_lea.sflag [#allocation3], %s384
        %s386 = sand.u32 %s67, 1
        %s387 = smul.addr %s386, 4
        %s388 = scalar_lea.vmem [#allocation2], %s387
        %p389 = pneg %p80
        %p390 = pneg %p77
        %p391 = scmp.lt.s32.totalorder %s33, 1
        %s392 = scalar_select %p391, %s33, 1
        %s393 = smul.addr %s392, 4
        %s394 = smul.addr %s393, 4
        %s395 = scalar_lea.vmem %s2, %s394
        %p396 = pneg %p106
        %p397 = pneg %p103
        %s398 = sand.u32 %s33, 1
        %s399 = scalar_lea.sflag [#allocation6], %s398
        %s400 = sand.u32 %s119, 1
        %s401 = smul.addr %s400, 8
        %s402 = scalar_lea.vmem [#allocation5], %s401
        %p403 = pneg %p132
        %p404 = pneg %p129
        %p405 = pneg %p153
        %p406 = pneg %p150
        %p407 = pneg %p174
        %p408 = pneg %p171
        %p409 = pneg %p195
        %p410 = pneg %p192
        %p411 = pneg %p221
        %p412 = pneg %p218
        %s413 = sand.u32 %s208, 1
        %s414 = scalar_lea.sflag [#allocation4], %s413
        %s415 = sand.u32 %s208, 1
        %s416 = smul.addr %s415, 16
        %s417 = scalar_lea.vmem [#allocation10], %s416
        %p418 = pneg %p247
        %p419 = pneg %p244
        %s420 = sand.u32 %s234, 1
        %s421 = scalar_lea.sflag [#allocation12], %s420
        %s422 = sand.u32 %s234, 1
        %s423 = smul.addr %s422, 8
        %s424 = scalar_lea.vmem [#allocation11], %s423
        %p425 = scmp.lt.s32.totalorder %s33, 1
        %s426 = scalar_select %p425, %s33, 1
        %s427 = smul.addr %s426, 8
        %s428 = scalar_lea.vmem %s0, %s427
        %p429 = scmp.lt.s32.totalorder %s33, 1
        %s430 = scalar_select %p429, %s33, 1
        %s431 = smul.addr %s430, 4
        %s432 = smul.addr %s431, 4
        %s433 = scalar_lea.vmem %s2, %s432
        %v435 = vld [vmem:[%s428] sm:$0xff]
        %v436 = vld [vmem:[%s356] sm:$0xf]
        %v437 = vld [vmem:[%s433] sm:$0xf]
        %v438 = vld [vmem:[%s433 + $0x4] sm:$0xf]
        %v439 = vld [vmem:[%s433 + $0x8] sm:$0xf]
        %v440 = vld [vmem:[%s433 + $0xc] sm:$0xf]
        %v441 = vld [vmem:[#allocation8] sm:$0xff]
        %v442 = vld [vmem:[#allocation8 + $0x8] sm:$0xff]
        %v443 = vpack.c.bf16 %v435, %v435
        %v444 = vld [vmem:[%s4] sm:$0xf]
        %v445 = vld [vmem:[%s4 + $0x4] sm:$0xf]
        %v446 = vld [vmem:[%s4 + $0x8] sm:$0xf]
        %v447 = vld [vmem:[%s4 + $0xc] sm:$0xf]
        %v448 = vld [vmem:[%s4 + $0x10] sm:$0xf]
        %v449 = vld [vmem:[%s4 + $0x14] sm:$0xf]
        %v450 = vld [vmem:[%s4 + $0x18] sm:$0xf]
        %v451 = vld [vmem:[%s4 + $0x1c] sm:$0xf]
        %v452 = vlaneseq
        %v453 = vshrl.u32 %v452, 7
        %v454 = vsub.s32 0, %v453
        %v455 = vrot.slane %v441, %v454
        %v464 = vunpack.c.l.b16 %v444
        %v465 = vunpack.c.l.b16 %v445
        %v466 = vunpack.c.l.b16 %v446
        %v467 = vunpack.c.l.b16 %v447
        %v468 = vunpack.c.l.b16 %v448
        %v469 = vunpack.c.l.b16 %v449
        %v470 = vunpack.c.l.b16 %v450
        %v471 = vunpack.c.l.b16 %v451
        %v472 = vpack.c.b16 %v465, %v464
        %v473 = vpack.c.b16 %v467, %v466
        %v474 = vpack.c.b16 %v469, %v468
        %v475 = vpack.c.b16 %v471, %v470
        %vm480 = vcmask 523264
        %v482 = vsel %vm480, %v443, 0
        %484 = vmatprep.subr.bf16.mxu0 0
        %485 = vmatpush1.bf16.msra.mxu0 %v472
        %486 = vmatprep.subr.bf16.mxu0 0
        %487 = vmatpush1.bf16.msra.mxu0 %v473
        %488 = vmatprep.subr.bf16.mxu0 0
        %489 = vmatpush1.bf16.msra.mxu0 %v474
        %490 = vmatprep.subr.bf16.mxu0 0
        %491 = vmatpush1.bf16.msra.mxu0 %v475
        %492 = vmatprep.subr.bf16.mxu0 0
        %493 = vmatpush1.bf16.msra.mxu0 0
        %494 = vmatprep.subr.bf16.mxu0 0
        %495 = vmatpush1.bf16.msra.mxu0 0
        %496 = vmatprep.subr.bf16.mxu0 0
        %497 = vmatpush1.bf16.msra.mxu0 0
        %498 = vmatprep.subr.bf16.mxu0 0
        %499 = vmatpush1.bf16.msra.mxu0 0
        %500 = vmatprep.subr.bf16.mxu0 0
        %501 = vmatpush1.bf16.msra.mxu0 0
        %502 = vmatprep.subr.bf16.mxu0 0
        %503 = vmatpush1.bf16.msra.mxu0 0
        %504 = vmatprep.subr.bf16.mxu0 0
        %505 = vmatpush1.bf16.msra.mxu0 0
        %506 = vmatprep.subr.bf16.mxu0 0
        %507 = vmatpush1.bf16.msra.mxu0 0
        %508 = vmatprep.subr.bf16.mxu0 0
        %509 = vmatpush1.bf16.msra.mxu0 0
        %510 = vmatprep.subr.bf16.mxu0 0
        %511 = vmatpush1.bf16.msra.mxu0 0
        %512 = vmatprep.subr.bf16.mxu0 0
        %513 = vmatpush1.bf16.msra.mxu0 0
        %514 = vmatprep.subr.bf16.mxu0 0
        %515 = vmatpush1.bf16.msra.mxu0 0
        %516 = vmatprep.mubr.bf16.mxu0 0
        %517 = vmatmul.mubr.bf16.gmra.mrb[0].mxu0 %v482
        %v518 = vpop.f32.mrb[0].mxu0
        %v519 = vadd.f32 %v455, %v518
        %v520 = vpop.f32.mrb[0].mxu0
        %v521 = vpop.f32.mrb[0].mxu0
        %v522 = vpop.f32.mrb[0].mxu0
        %523 = vdwg.mxu0
        %v524 = vxor.u32 %v519, 2147483648
        %v525 = vmul.f32 %v524, 1.442695
        %v526 = vpow.pop %v525
        %v527 = vadd.f32 %v526, 1.0
        %v528 = vrcp.pop %v527
        %v529 = vmul.f32 1.0, %v528
        %531 = vrot.lane.b32.xlu0 %v519, 32
        %v532 = vpop.permute.xlu0 %531
        %v534 = vmul.f32 %v529, %v532
        %536 = vrot.lane.b32.xlu0 %v534, 64
        %v537 = vpop.permute.xlu0 %536
        %v539 = vadd.f32 %v519, %v537
        %v540 = vtanh.pop %v539
        %v541 = vsub.f32 1.0, %v529
        %543 = vrot.lane.b32.xlu0 %v540, 96
        %v544 = vpop.permute.xlu0 %543
        %v546 = vmul.f32 %v541, %v544
        %v547 = vmul.f32 %v529, %v435
        %v548 = vadd.f32 %v546, %v547
        %v549 = vpack.c.bf16 %v548, %v548
        %551 = vrot.lane.b32.xlu0 %v549, 96
        %v552 = vpop.permute.xlu0 %551
        %v557 = vunpack.c.l.b16 %v437
        %v558 = vunpack.c.l.b16 %v438
        %v559 = vunpack.c.l.b16 %v439
        %v560 = vunpack.c.l.b16 %v440
        %v561 = vpack.c.b16 %v558, %v557
        %v562 = vpack.c.b16 %v560, %v559
        %vm565 = vcmask 261120
        %v567 = vsel %vm565, %v552, 0
        %569 = vmatprep.subr.bf16.mxu0 0
        %570 = vmatpush1.bf16.msra.mxu0 %v561
        %571 = vmatprep.subr.bf16.mxu0 0
        %572 = vmatpush1.bf16.msra.mxu0 %v562
        %573 = vmatprep.subr.bf16.mxu0 0
        %574 = vmatpush1.bf16.msra.mxu0 0
        %575 = vmatprep.subr.bf16.mxu0 0
        %576 = vmatpush1.bf16.msra.mxu0 0
        %577 = vmatprep.subr.bf16.mxu0 0
        %578 = vmatpush1.bf16.msra.mxu0 0
        %579 = vmatprep.subr.bf16.mxu0 0
        %580 = vmatpush1.bf16.msra.mxu0 0
        %581 = vmatprep.subr.bf16.mxu0 0
        %582 = vmatpush1.bf16.msra.mxu0 0
        %583 = vmatprep.subr.bf16.mxu0 0
        %584 = vmatpush1.bf16.msra.mxu0 0
        %585 = vmatprep.subr.bf16.mxu0 0
        %586 = vmatpush1.bf16.msra.mxu0 0
        %587 = vmatprep.subr.bf16.mxu0 0
        %588 = vmatpush1.bf16.msra.mxu0 0
        %589 = vmatprep.subr.bf16.mxu0 0
        %590 = vmatpush1.bf16.msra.mxu0 0
        %591 = vmatprep.subr.bf16.mxu0 0
        %592 = vmatpush1.bf16.msra.mxu0 0
        %593 = vmatprep.subr.bf16.mxu0 0
        %594 = vmatpush1.bf16.msra.mxu0 0
        %595 = vmatprep.subr.bf16.mxu0 0
        %596 = vmatpush1.bf16.msra.mxu0 0
        %597 = vmatprep.subr.bf16.mxu0 0
        %598 = vmatpush1.bf16.msra.mxu0 0
        %599 = vmatprep.subr.bf16.mxu0 0
        %600 = vmatpush1.bf16.msra.mxu0 0
        %601 = vmatprep.mubr.bf16.mxu0 0
        %602 = vmatmul.mubr.bf16.gmra.mrb[0].mxu0 %v567
        %v603 = vpop.f32.mrb[0].mxu0
        %v604 = vadd.f32 0.0, %v603
        %v605 = vpop.f32.mrb[0].mxu0
        %v606 = vpop.f32.mrb[0].mxu0
        %v607 = vpop.f32.mrb[0].mxu0
        %608 = vdwg.mxu0
        %vm609 = vcmask 64512
        %v610 = vsel %vm609, %v604, -inf
        %611 = vmax.xlane.f32.xlu0 %v610
        %v612 = vpop.xlane.xlu0 %611
        %v613 = vsub.f32 %v604, %v612
        %v614 = vmul.f32 %v613, 1.442695
        %v615 = vpow.pop %v614
        %v616 = vsel %vm609, %v615, 0.0
        %617 = vadd.xlane.f32.xlu0 %v616
        %v618 = vpop.xlane.xlu0 %617
        %v619 = vrcp.pop %v618
        %v620 = vmul.f32 %v615, %v619
        %v621 = vpack.c.bf16 %v620, %v620
        %v623 = vsel %vm609, %v621, 0
        %vm625 = vcmask 1043456
        %v627 = vsel %vm625, %v436, 0
        %629 = vmatprep.subr.bf16.mxu0 0
        %630 = vmatpush1.bf16.msra.mxu0 %v627
        %631 = vmatprep.subr.bf16.mxu0 0
        %632 = vmatpush1.bf16.msra.mxu0 0
        %633 = vmatprep.subr.bf16.mxu0 0
        %634 = vmatpush1.bf16.msra.mxu0 0
        %635 = vmatprep.subr.bf16.mxu0 0
        %636 = vmatpush1.bf16.msra.mxu0 0
        %637 = vmatprep.subr.bf16.mxu0 0
        %638 = vmatpush1.bf16.msra.mxu0 0
        %639 = vmatprep.subr.bf16.mxu0 0
        %640 = vmatpush1.bf16.msra.mxu0 0
        %641 = vmatprep.subr.bf16.mxu0 0
        %642 = vmatpush1.bf16.msra.mxu0 0
        %643 = vmatprep.subr.bf16.mxu0 0
        %644 = vmatpush1.bf16.msra.mxu0 0
        %645 = vmatprep.subr.bf16.mxu0 0
        %646 = vmatpush1.bf16.msra.mxu0 0
        %647 = vmatprep.subr.bf16.mxu0 0
        %648 = vmatpush1.bf16.msra.mxu0 0
        %649 = vmatprep.subr.bf16.mxu0 0
        %650 = vmatpush1.bf16.msra.mxu0 0
        %651 = vmatprep.subr.bf16.mxu0 0
        %652 = vmatpush1.bf16.msra.mxu0 0
        %653 = vmatprep.subr.bf16.mxu0 0
        %654 = vmatpush1.bf16.msra.mxu0 0
        %655 = vmatprep.subr.bf16.mxu0 0
        %656 = vmatpush1.bf16.msra.mxu0 0
        %657 = vmatprep.subr.bf16.mxu0 0
        %658 = vmatpush1.bf16.msra.mxu0 0
        %659 = vmatprep.subr.bf16.mxu0 0
        %660 = vmatpush1.bf16.msra.mxu0 0
        %661 = vmatprep.mubr.bf16.mxu0 0
        %662 = vmatmul.mubr.bf16.gmra.mrb[0].mxu0 %v623
        %v663 = vpop.f32.mrb[0].mxu0
        %v664 = vadd.f32 0.0, %v663
        %v665 = vpop.f32.mrb[0].mxu0
        %v666 = vpop.f32.mrb[0].mxu0
        %v667 = vpop.f32.mrb[0].mxu0
        %668 = vdwg.mxu0
        %670 = vrot.lane.b32.xlu0 %v548, 96
        %v671 = vpop.permute.xlu0 %670
        %674 = vrot.lane.b32.xlu0 %v664, 32
        %v675 = vpop.permute.xlu0 %674
        %678 = vrot.lane.b32.xlu0 %v435, 64
        %v679 = vpop.permute.xlu0 %678
        %v681 = vsel %vm565, %v671, %v675
        %v682 = vsel %vm480, %v681, %v679
        %v683 = vpack.c.bf16 %v682, %v682
        %v684 = vld [vmem:[#allocation7] sm:$0xff]
        %v685 = vld [vmem:[#allocation7 + $0x8] sm:$0xff]
        %v686 = vld [vmem:[#allocation7 + $0x10] sm:$0xff]
        %v687 = vld [vmem:[#allocation7 + $0x18] sm:$0xff]
        %v688 = vld [vmem:[#allocation7 + $0x20] sm:$0xff]
        %v689 = vld [vmem:[#allocation7 + $0x28] sm:$0xff]
        %v690 = vld [vmem:[#allocation7 + $0x30] sm:$0xff]
        %v691 = vld [vmem:[#allocation7 + $0x38] sm:$0xff]
        %v692 = vld [vmem:[#allocation7 + $0x40] sm:$0xff]
        %v693 = vld [vmem:[#allocation7 + $0x48] sm:$0xff]
        %v694 = vld [vmem:[#allocation7 + $0x50] sm:$0xff]
        %v695 = vld [vmem:[#allocation7 + $0x58] sm:$0xff]
        %v708 = vunpack.c.l.b16 %v684
        %v709 = vunpack.c.h.b16 %v684
        %v710 = vunpack.c.l.b16 %v685
        %v711 = vunpack.c.h.b16 %v685
        %v712 = vunpack.c.l.b16 %v686
        %v713 = vunpack.c.h.b16 %v686
        %v714 = vunpack.c.l.b16 %v687
        %v715 = vunpack.c.h.b16 %v687
        %v716 = vunpack.c.l.b16 %v688
        %v717 = vunpack.c.h.b16 %v688
        %v718 = vunpack.c.l.b16 %v689
        %v719 = vunpack.c.h.b16 %v689
        %v720 = vunpack.c.l.b16 %v690
        %v721 = vunpack.c.h.b16 %v690
        %v722 = vunpack.c.l.b16 %v691
        %v723 = vunpack.c.h.b16 %v691
        %v724 = vunpack.c.l.b16 %v692
        %v725 = vunpack.c.h.b16 %v692
        %v726 = vunpack.c.l.b16 %v693
        %v727 = vunpack.c.h.b16 %v693
        %v728 = vunpack.c.l.b16 %v694
        %v729 = vunpack.c.h.b16 %v694
        %v730 = vunpack.c.l.b16 %v695
        %v731 = vunpack.c.h.b16 %v695
        %v732 = vpack.c.b16 %v710, %v708
        %v733 = vpack.c.b16 %v711, %v709
        %v734 = vpack.c.b16 %v714, %v712
        %v735 = vpack.c.b16 %v715, %v713
        %v736 = vpack.c.b16 %v718, %v716
        %v737 = vpack.c.b16 %v719, %v717
        %v738 = vpack.c.b16 %v722, %v720
        %v739 = vpack.c.b16 %v723, %v721
        %v740 = vpack.c.b16 %v726, %v724
        %v741 = vpack.c.b16 %v727, %v725
        %v742 = vpack.c.b16 %v730, %v728
        %v743 = vpack.c.b16 %v731, %v729
        %vm756 = vcmask 785408
        %v758 = vsel %vm756, %v683, 0
        %760 = vmatprep.subr.bf16.mxu0 %v733
        %761 = vmatpush1.bf16.msra.mxu0 %v732
        %762 = vmatprep.subr.bf16.mxu0 %v735
        %763 = vmatpush1.bf16.msra.mxu0 %v734
        %764 = vmatprep.subr.bf16.mxu0 %v737
        %765 = vmatpush1.bf16.msra.mxu0 %v736
        %766 = vmatprep.subr.bf16.mxu0 %v739
        %767 = vmatpush1.bf16.msra.mxu0 %v738
        %768 = vmatprep.subr.bf16.mxu0 %v741
        %769 = vmatpush1.bf16.msra.mxu0 %v740
        %770 = vmatprep.subr.bf16.mxu0 %v743
        %771 = vmatpush1.bf16.msra.mxu0 %v742
        %772 = vmatprep.subr.bf16.mxu0 0
        %773 = vmatpush1.bf16.msra.mxu0 0
        %774 = vmatprep.subr.bf16.mxu0 0
        %775 = vmatpush1.bf16.msra.mxu0 0
        %776 = vmatprep.subr.bf16.mxu0 0
        %777 = vmatpush1.bf16.msra.mxu0 0
        %778 = vmatprep.subr.bf16.mxu0 0
        %779 = vmatpush1.bf16.msra.mxu0 0
        %780 = vmatprep.subr.bf16.mxu0 0
        %781 = vmatpush1.bf16.msra.mxu0 0
        %782 = vmatprep.subr.bf16.mxu0 0
        %783 = vmatpush1.bf16.msra.mxu0 0
        %784 = vmatprep.subr.bf16.mxu0 0
        %785 = vmatpush1.bf16.msra.mxu0 0
        %786 = vmatprep.subr.bf16.mxu0 0
        %787 = vmatpush1.bf16.msra.mxu0 0
        %788 = vmatprep.subr.bf16.mxu0 0
        %789 = vmatpush1.bf16.msra.mxu0 0
        %790 = vmatprep.subr.bf16.mxu0 0
        %791 = vmatpush1.bf16.msra.mxu0 0
        %792 = vmatprep.mubr.bf16.mxu0 0
        %793 = vmatmul.mubr.bf16.gmra.mrb[0].mxu0 %v758
        %v794 = vpop.f32.mrb[0].mxu0
        %v795 = vadd.f32 0.0, %v794
        %v796 = vpop.f32.mrb[0].mxu0
        %v797 = vadd.f32 0.0, %v796
        %v798 = vpop.f32.mrb[0].mxu0
        %v799 = vpop.f32.mrb[0].mxu0
        %800 = vdwg.mxu0
        %v801 = vlaneseq
        %v802 = vshrl.u32 %v801, 7
        %v803 = vsub.s32 2, %v802
        %v804 = vrot.slane %v441, %v803
        %806 = vrot.lane.b32.xlu0 %v804, 127
        %v807 = vpop.permute.xlu0 %806
        %v809 = vadd.f32 %v797, %v807
        %v810 = vxor.u32 %v809, 2147483648
        %v811 = vmul.f32 %v810, 1.442695
        %v812 = vpow.pop %v811
        %v813 = vadd.f32 %v812, 1.0
        %v814 = vrcp.pop %v813
        %v815 = vmul.f32 1.0, %v814
        %v816 = vlaneseq
        %v817 = vshrl.u32 %v816, 7
        %v818 = vsub.s32 1, %v817
        %v819 = vrot.slane %v441, %v818
        %v820 = vlaneseq
        %v821 = vshrl.u32 %v820, 7
        %v822 = vsub.s32 1, %v821
        %v823 = vrot.slane %v442, %v822
        %v824 = vadd.f32 %v795, %v819
        %v825 = vadd.f32 %v797, %v823
        %v826 = vmax.f32 %v824, %v825
        %827 = vmax.xlane.f32.xlu0 %v826
        %v828 = vpop.xlane.xlu0 %827
        %v829 = vsub.f32 %v824, %v828
        %v830 = vsub.f32 %v825, %v828
        %v831 = vmul.f32 %v829, 1.442695
        %v832 = vpow.pop %v831
        %v833 = vmul.f32 %v830, 1.442695
        %v834 = vpow.pop %v833
        %v835 = vadd.f32 %v832, %v834
        %836 = vadd.xlane.f32.xlu0 %v835
        %v837 = vpop.xlane.xlu0 %836
        %v838 = vrcp.pop %v837
        %v839 = vmul.f32 %v832, %v838
        %v840 = vmul.f32 %v834, %v838
        %v841 = vld [vmem:[%s365] sm:$0xff]
        %v843 = vunpack.c.l.b16 %v841
        %v844 = vunpack.c.h.b16 %v841
        %v845 = vpack.c.b16 %v843, %v843
        %v846 = vpack.c.b16 %v844, %v844
        %v848 = vsel %vm625, %v845, 0
        %v851 = vsel %vm625, %v846, 0
        %853 = vmatprep.subr.bf16.mxu0 %v851
        %854 = vmatpush1.bf16.msra.mxu0 %v848
        %855 = vmatprep.subr.bf16.mxu0 0
        %856 = vmatpush1.bf16.msra.mxu0 0
        %857 = vmatprep.subr.bf16.mxu0 0
        %858 = vmatpush1.bf16.msra.mxu0 0
        %859 = vmatprep.subr.bf16.mxu0 0
        %860 = vmatpush1.bf16.msra.mxu0 0
        %861 = vmatprep.subr.bf16.mxu0 0
        %862 = vmatpush1.bf16.msra.mxu0 0
        %863 = vmatprep.subr.bf16.mxu0 0
        %864 = vmatpush1.bf16.msra.mxu0 0
        %865 = vmatprep.subr.bf16.mxu0 0
        %866 = vmatpush1.bf16.msra.mxu0 0
        %867 = vmatprep.subr.bf16.mxu0 0
        %868 = vmatpush1.bf16.msra.mxu0 0
        %869 = vmatprep.subr.bf16.mxu0 0
        %870 = vmatpush1.bf16.msra.mxu0 0
        %871 = vmatprep.subr.bf16.mxu0 0
        %872 = vmatpush1.bf16.msra.mxu0 0
        %873 = vmatprep.subr.bf16.mxu0 0
        %874 = vmatpush1.bf16.msra.mxu0 0
        %875 = vmatprep.subr.bf16.mxu0 0
        %876 = vmatpush1.bf16.msra.mxu0 0
        %877 = vmatprep.subr.bf16.mxu0 0
        %878 = vmatpush1.bf16.msra.mxu0 0
        %879 = vmatprep.subr.bf16.mxu0 0
        %880 = vmatpush1.bf16.msra.mxu0 0
        %881 = vmatprep.subr.bf16.mxu0 0
        %882 = vmatpush1.bf16.msra.mxu0 0
        %883 = vmatprep.subr.bf16.mxu0 0
        %884 = vmatpush1.bf16.msra.mxu0 0
        %885 = vmatprep.mubr.bf16.mxu0 0
        %886 = vmatmul.mubr.bf16.gmra.mrb[0].mxu0 %v623
        %v887 = vpop.f32.mrb[0].mxu0
        %v888 = vadd.f32 0.0, %v887
        %v889 = vpop.f32.mrb[0].mxu0
        %v890 = vadd.f32 0.0, %v889
        %v891 = vpop.f32.mrb[0].mxu0
        %v892 = vpop.f32.mrb[0].mxu0
        %893 = vdwg.mxu0
        %895 = vset.pattern.permute.xlu0 127
        %896 = vperm.xlu0 %895, %v815
        %v897 = vpop.permute.xlu0 %896
        %v899 = vmul.f32 %v897, %v839
        %v900 = vmul.f32 %v897, %v840
        %v901 = vsub.f32 1.0, %v815
        %903 = vset.pattern.permute.xlu0 127
        %904 = vperm.xlu0 %903, %v901
        %v905 = vpop.permute.xlu0 %904
        %v907 = vmul.f32 %v905, %v888
        %v908 = vmul.f32 %v905, %v890
        %v909 = vadd.f32 %v899, %v907
        %v910 = vadd.f32 %v900, %v908
        %v911 = vlog2.pop %v909
        %v912 = vmul.f32 %v911, 0.6931472
        %v913 = vlog2.pop %v910
        %v914 = vmul.f32 %v913, 0.6931472
        %915 = vst [vmem:[%s417] sm:$0xff] %v912
        %916 = vst [vmem:[%s417 + $0x8] sm:$0xff] %v914
        %v917 = vsel %vm565, %v671, 0.0
        %918 = vst [vmem:[%s424] sm:$0xff] %v917
        %s919 = sand.u32 %s208, 1
        %s920 = scalar_lea.sflag [#allocation4], %s919
        %s921 = sand.u32 %s208, 1
        %s922 = smul.addr %s921, 16
        %s923 = scalar_lea.vmem [#allocation10], %s922
        %s924 = sand.u32 %s234, 1
        %s925 = scalar_lea.sflag [#allocation12], %s924
        %s926 = sand.u32 %s234, 1
        %s927 = smul.addr %s926, 8
        %s928 = scalar_lea.vmem [#allocation11], %s927
        // Predicated region
        $region65: #{tpu_custom_call.1} parent=47 // pred_check
          %p929 = pneg %p218
        $region66: #{tpu_custom_call.1} parent=47 // pred_check_branch
          %931 = sbr.rel (%p929) target = $region68
        $region67: #{tpu_custom_call.1} parent=47 // pred_region
          %s933 = ssub.s32 256, 256
          %934 = vsyncadd %s920, %s933
          %s935 = smul.addr %s33, 2
          %s936 = smul.addr %s935, 128
          %s937 = scalar_lea.hbm %s7, %s936
          %s939 = sshll.u32 %s923, 4
          %s940 = int_to_ptr.vmem [resolvable:$true] %s939
          %942 = dma.vmem_to_hbm [thread:$0]  %s940, 256, %s937, %s920
        $region68: #{tpu_custom_call.1} parent=47 // pred_fallthru
          _
        // Predicated region
        $region69: #{tpu_custom_call.1} parent=47 // pred_check
          %p943 = pneg %p244
        $region70: #{tpu_custom_call.1} parent=47 // pred_check_branch
          %945 = sbr.rel (%p943) target = $region72
        $region71: #{tpu_custom_call.1} parent=47 // pred_region
          %s947 = ssub.s32 128, 128
          %948 = vsyncadd %s925, %s947
          %s949 = smul.addr %s33, 128
          %s950 = scalar_lea.hbm %s8, %s949
          %s952 = sshll.u32 %s928, 4
          %s953 = int_to_ptr.vmem [resolvable:$true] %s952
          %955 = dma.vmem_to_hbm [thread:$0]  %s953, 128, %s950, %s925
        $region72: #{tpu_custom_call.1} parent=47 // pred_fallthru
          _
      $region48: #{tpu_custom_call.1} parent=5 // pred_fallthru
        _
      %p956 = scmp.le.s32.totalorder 2, %s28
      // Predicated region
      $region73: #{tpu_custom_call.1} parent=5 // pred_check
        %p957 = pneg %p956
      $region74: #{tpu_custom_call.1} parent=5 // pred_check_branch
        %959 = sbr.rel (%p957) target = $region76
      $region75: #{tpu_custom_call.1} parent=5 // pred_region
        %s960 = ssub.s32 %s28, 2
        // Predicated region
        $region77: #{tpu_custom_call.1} parent=75 // pred_check
          %p961 = pneg %p224
        $region78: #{tpu_custom_call.1} parent=75 // pred_check_branch
          %963 = sbr.rel (%p961) target = $region80
        $region79: #{tpu_custom_call.1} parent=75 // pred_region
          %s964 = sand.u32 %s209, 1
          %s965 = scalar_lea.sflag [#allocation4], %s964
          %s966 = sand.u32 %s209, 1
          %s967 = smul.addr %s966, 16
          %s968 = scalar_lea.vmem [#allocation10], %s967
          %969 = dma.done %s965, 256
        $region80: #{tpu_custom_call.1} parent=75 // pred_fallthru
          _
        // Predicated region
        $region81: #{tpu_custom_call.1} parent=75 // pred_check
          %p970 = pneg %p250
        $region82: #{tpu_custom_call.1} parent=75 // pred_check_branch
          %972 = sbr.rel (%p970) target = $region84
        $region83: #{tpu_custom_call.1} parent=75 // pred_region
          %s973 = sand.u32 %s235, 1
          %s974 = scalar_lea.sflag [#allocation12], %s973
          %s975 = sand.u32 %s235, 1
          %s976 = smul.addr %s975, 8
          %s977 = scalar_lea.vmem [#allocation11], %s976
          %978 = dma.done %s974, 128
        $region84: #{tpu_custom_call.1} parent=75 // pred_fallthru
          _
      $region76: #{tpu_custom_call.1} parent=5 // pred_fallthru
        _
    $region6: #{tpu_custom_call.1} parent=1 // loop_footer
      %s32 = sadd.s32 1, %s28
    $region7: #{tpu_custom_call.1} parent=1 // loop_footer_branch
      %27 = sbr.rel target = $region3
    $region8: #{tpu_custom_call.1} parent=1 // loop_exit
      _
    %979 = vsyncpa [#allocation3], 1
    %s980 = scalar_lea.sflag [#allocation3], 1
    %981 = vsyncpa %s980, 1
    %982 = vsyncpa [#allocation6], 1
    %s983 = scalar_lea.sflag [#allocation6], 1
    %984 = vsyncpa %s983, 1
    %985 = vsyncpa [#allocation9], 1
    %986 = vsyncpa [#allocation4], 1
    %s987 = scalar_lea.sflag [#allocation4], 1
    %988 = vsyncpa %s987, 1
    %989 = vsyncpa [#allocation12], 1
    %s990 = scalar_lea.sflag [#allocation12], 1
    %991 = vsyncpa %s990, 1

</llo_original>
